<compile_context>
chip_gen: v7x
topology: tpu7x:2x2x1
jax: 0.10.0
libtpu: 0.0.40
codegen_flags: <defaults>
</compile_context>

<pallas_src>
import math

import jax
import jax.numpy as jnp
from jax import lax
from jax.experimental import pallas as pl
from jax.experimental.pallas import tpu as pltpu


def _round_up(v, m):
    return ((v + m - 1) // m) * m


def _sublane_multiple(dtype):
    # Native TPU tile is (8, 128) in 32-bit units; sub-32-bit dtypes pack along
    # sublanes, so bf16 wants 16-row blocks and int8/fp8 want 32-row blocks.
    return max(8, 32 // jnp.dtype(dtype).itemsize)


def _pad2d(a, rows, cols):
    pr = rows - a.shape[0]
    pc = cols - a.shape[1]
    if pr or pc:
        a = jnp.pad(a, ((0, pr), (0, pc)))
    return a


def _nl_kernel_f32out(x_ref, s_ref, w_ref, b_ref, o_ref):
    """f32 output: accumulate directly into the resident output block."""
    k = pl.program_id(2)

    @pl.when(k == 0)
    def _init():
        # Fold the bias into the accumulator init (no finalize add).
        o_ref[...] = jnp.broadcast_to(b_ref[...].astype(o_ref.dtype), o_ref.shape)

    # Per-column inverse weight norm for this K tile (resident block, sublane
    # slice), applied to the contraction axis of x in f32, then fed to the MXU
    # in the weight's native dtype.
    s = s_ref[pl.ds(k, 1), :].astype(jnp.float32)                    # (1, tk)
    xs = (x_ref[...].astype(jnp.float32) * s).astype(w_ref.dtype)    # (tm, tk)

    # Weight tile stays in its native (N, K) layout: contract on the last dims.
    o_ref[...] += lax.dot_general(
        xs, w_ref[...],
        dimension_numbers=(((1,), (1,)), ((), ())),
        preferred_element_type=jnp.float32)


def _nl_kernel_acc(x_ref, s_ref, w_ref, b_ref, o_ref, acc_ref):
    """Non-f32 output: f32 VMEM accumulator, cast on the last K step."""
    k = pl.program_id(2)

    @pl.when(k == 0)
    def _init():
        acc_ref[...] = jnp.broadcast_to(b_ref[...].astype(jnp.float32),
                                        acc_ref.shape)

    s = s_ref[pl.ds(k, 1), :].astype(jnp.float32)                    # (1, tk)
    xs = (x_ref[...].astype(jnp.float32) * s).astype(w_ref.dtype)    # (tm, tk)

    acc_ref[...] += lax.dot_general(
        xs, w_ref[...],
        dimension_numbers=(((1,), (1,)), ((), ())),
        preferred_element_type=jnp.float32)

    @pl.when(k == pl.num_programs(2) - 1)
    def _finalize():
        o_ref[...] = acc_ref[...].astype(o_ref.dtype)


def normalized_linear(x, weight, bias=None, *, tm=None, tn=None, tk=None):
    """y = x @ (weight / ||weight||_{dim=0}).T + bias as a Pallas TPU kernel."""
    M, K = x.shape
    N, K_w = weight.shape
    assert K == K_w, (x.shape, weight.shape)
    out_dtype = x.dtype

    # --- weight-only prologue (could be cached across calls for a static W) --
    # Per in_feature column inverse L2 norm over out_features (PyTorch dim=0).
    # TODO(synk): like the PyTorch module, no eps clamp — an all-zero weight
    # column yields inf here (and inf*0 = nan for zero x entries).
    w_f32 = weight.astype(jnp.float32)
    inv_norm = lax.rsqrt(jnp.sum(w_f32 * w_f32, axis=0, keepdims=True))   # (1, K)

    if bias is None:
        bias2d = jnp.zeros((1, N), jnp.float32)
    else:
        bias2d = bias.reshape(1, N).astype(jnp.float32)

    # --- tile selection ------------------------------------------------------
    sub = _sublane_multiple(out_dtype)
    m_aligned = _round_up(M, sub)
    n128 = _round_up(N, 128)
    k128 = _round_up(K, 128)

    auto_tn = tn is None
    if tm is None:
        # Small-M fast path: a single i-tile means the weight streams through
        # HBM exactly once.  Otherwise 512-wide tiles for bandwidth efficiency.
        tm = m_aligned if m_aligned <= 512 else 512
    M_p = _round_up(M, tm)

    if tk is None:
        tk = min(512, k128)
    K_p = _round_up(K, tk)

    if tn is None:
        tn = min(512, n128)
    if auto_tn and (M_p // tm == 1) and n128 >= 256 and (n128 // tn) < 2:
        # Keep >= 2 tiles on a 'parallel' axis so both v7x TensorCores get work
        # when the small-M path collapses the i axis.
        tn = min(tn, 128 * max(1, (n128 // 128) // 2))
    N_p = _round_up(N, tn)

    # --- padding (no-op when shapes are already tile-aligned) ----------------
    x_p = _pad2d(x, M_p, K_p)
    w_p = _pad2d(weight, N_p, K_p)                              # native (N, K)
    s_p = _pad2d(inv_norm, 1, K_p).reshape(K_p // tk, tk)       # VMEM-resident
    b_p = _pad2d(bias2d, 1, N_p)

    grid = (M_p // tm, N_p // tn, K_p // tk)

    f32_out = out_dtype == jnp.float32
    kernel = _nl_kernel_f32out if f32_out else _nl_kernel_acc
    scratch = [] if f32_out else [pltpu.VMEM((tm, tn), jnp.float32)]

    out = pl.pallas_call(
        kernel,
        out_shape=jax.ShapeDtypeStruct((M_p, N_p), out_dtype),
        grid_spec=pltpu.PrefetchScalarGridSpec(
            num_scalar_prefetch=0,
            grid=grid,
            in_specs=[
                pl.BlockSpec((tm, tk), lambda i, j, k: (i, k)),         # x tile
                pl.BlockSpec((K_p // tk, tk), lambda i, j, k: (0, 0)),  # inv_norm (resident)
                pl.BlockSpec((tn, tk), lambda i, j, k: (j, k)),         # weight tile (N, K)
                pl.BlockSpec((1, tn), lambda i, j, k: (0, j)),          # bias tile
            ],
            out_specs=pl.BlockSpec((tm, tn), lambda i, j, k: (i, j)),
            scratch_shapes=scratch,
        ),
        compiler_params=pltpu.CompilerParams(
            dimension_semantics=("parallel", "parallel", "arbitrary"),
        ),
    )(x_p, s_p, w_p, b_p)

    return out[:M, :N]


def normalized_linear_ref(x, weight, bias=None):
    """Pure-JAX reference matching the PyTorch module."""
    w32 = weight.astype(jnp.float32)
    col_norm = jnp.sqrt(jnp.sum(w32 * w32, axis=0, keepdims=True))
    w_n = w32 / col_norm
    y = jnp.dot(x.astype(jnp.float32), w_n.T, precision=jax.lax.Precision.HIGHEST)
    if bias is not None:
        y = y + bias.astype(jnp.float32)
    return y


if __name__ == "__main__":
    key = jax.random.PRNGKey(0)
    k1, k2, k3, k4, k5, k6, k7, k8 = jax.random.split(key, 8)

    # --- Case 1: the module's natural small shapes (batch=8, in=32, out=16) ---
    B, IN, OUT = 8, 32, 16
    bound = 1.0 / math.sqrt(IN)
    w1 = jax.random.uniform(k1, (OUT, IN), jnp.float32, minval=-bound, maxval=bound)
    b1 = jax.random.uniform(k2, (OUT,), jnp.float32, minval=-bound, maxval=bound)
    x1 = jax.random.normal(k3, (B, IN), jnp.float32)

    out1 = jax.block_until_ready(normalized_linear(x1, w1, b1))
    ref1 = normalized_linear_ref(x1, w1, b1)
    assert out1.shape == (B, OUT)
    assert jnp.allclose(out1, ref1, atol=1e-4, rtol=1e-4), float(jnp.max(jnp.abs(out1 - ref1)))

    # --- Case 2: exercise M/N/K tiling, padding, K accumulation, tn guard -----
    M2, IN2, OUT2 = 96, 320, 192
    bound2 = 1.0 / math.sqrt(IN2)
    w2 = jax.random.uniform(k4, (OUT2, IN2), jnp.float32, minval=-bound2, maxval=bound2)
    b2 = jax.random.uniform(k5, (OUT2,), jnp.float32, minval=-bound2, maxval=bound2)
    x2 = jax.random.normal(k6, (M2, IN2), jnp.float32)

    out2 = jax.block_until_ready(normalized_linear(x2, w2, b2, tk=128))
    ref2 = normalized_linear_ref(x2, w2, b2)
    assert out2.shape == (M2, OUT2)
    assert jnp.allclose(out2, ref2, atol=1e-4, rtol=1e-4), float(jnp.max(jnp.abs(out2 - ref2)))

    # --- Case 3: bf16 path (dtype-aware sublane rounding, acc scratch, no bias)
    M3, IN3, OUT3 = 8, 256, 128
    bound3 = 1.0 / math.sqrt(IN3)
    w3 = jax.random.uniform(k7, (OUT3, IN3), jnp.float32,
                            minval=-bound3, maxval=bound3).astype(jnp.bfloat16)
    x3 = jax.random.normal(k8, (M3, IN3), jnp.float32).astype(jnp.bfloat16)

    out3 = jax.block_until_ready(normalized_linear(x3, w3, None))
    ref3 = normalized_linear_ref(x3, w3, None)
    assert out3.shape == (M3, OUT3)
    assert jnp.allclose(out3.astype(jnp.float32), ref3, atol=5e-2, rtol=5e-2), \
        float(jnp.max(jnp.abs(out3.astype(jnp.float32) - ref3)))

    print("KERNEL_OK")
</pallas_src>

<mosaic_0001>
module attributes {stable_mosaic.version = 11 : i64} {
  func.func @_nl_kernel_f32out(%arg0: i32, %arg1: i32, %arg2: i32, %arg3: memref<8x128xf32, #tpu.memory_space<vmem>>, %arg4: memref<1x128xf32, #tpu.memory_space<vmem>>, %arg5: memref<128x128xf32, #tpu.memory_space<vmem>>, %arg6: memref<1x128xf32, #tpu.memory_space<vmem>>, %arg7: memref<8x128xf32, #tpu.memory_space<vmem>>) attributes {dimension_semantics = [#tpu.dimension_semantics<parallel>, #tpu.dimension_semantics<parallel>, #tpu.dimension_semantics<arbitrary>], iteration_bounds = array<i64: 1, 1, 1>, scalar_prefetch = 0 : i64, scratch_operands = 0 : i64, tpu.core_type = #tpu.core_type<tc>, window_params = [{transform_indices = @transform_0, window_bounds = array<i64: 8, 128>}, {pipeline_mode = #tpu.pipeline_mode<synchronous>, transform_indices = @transform_1, window_bounds = array<i64: 1, 128>}, {transform_indices = @transform_2, window_bounds = array<i64: 128, 128>}, {transform_indices = @transform_3, window_bounds = array<i64: 1, 128>}, {transform_indices = @transform_4, window_bounds = array<i64: 8, 128>}]} {
    %c0_i32 = arith.constant 0 : i32
    %0 = arith.cmpi eq, %arg2, %c0_i32 : i32
    %1 = arith.extui %0 : i1 to i32
    %c0_i32_0 = arith.constant 0 : i32
    %2 = arith.cmpi ne, %1, %c0_i32_0 : i32
    scf.if %2 {
      %c0_9 = arith.constant 0 : index
      %c0_10 = arith.constant 0 : index
      %13 = vector.load %arg6[%c0_9, %c0_10] : memref<1x128xf32, #tpu.memory_space<vmem>>, vector<1x128xf32>
      %14 = vector.shape_cast %13 : vector<1x128xf32> to vector<1x128xf32>
      %15 = vector.broadcast %14 : vector<1x128xf32> to vector<8x128xf32>
      %c0_11 = arith.constant 0 : index
      %c0_12 = arith.constant 0 : index
      %16 = vector.load %arg7[%c0_11, %c0_12] : memref<8x128xf32, #tpu.memory_space<vmem>>, vector<8x128xf32>
      tpu.vector_store %arg7[%c0_11, %c0_12], %15 {strides = array<i32>} : memref<8x128xf32, #tpu.memory_space<vmem>>, vector<8x128xf32>,
    } else {
    }
    %3 = arith.index_cast %arg2 : i32 to index
    %c0 = arith.constant 0 : index
    %4 = vector.load %arg4[%3, %c0] : memref<1x128xf32, #tpu.memory_space<vmem>>, vector<1x128xf32>
    %c0_1 = arith.constant 0 : index
    %c0_2 = arith.constant 0 : index
    %5 = vector.load %arg3[%c0_1, %c0_2] : memref<8x128xf32, #tpu.memory_space<vmem>>, vector<8x128xf32>
    %6 = vector.broadcast %4 : vector<1x128xf32> to vector<8x128xf32>
    %7 = arith.mulf %5, %6 : vector<8x128xf32>
    %c0_3 = arith.constant 0 : index
    %c0_4 = arith.constant 0 : index
    %8 = vector.load %arg7[%c0_3, %c0_4] : memref<8x128xf32, #tpu.memory_space<vmem>>, vector<8x128xf32>
    %c0_5 = arith.constant 0 : index
    %c0_6 = arith.constant 0 : index
    %9 = vector.load %arg5[%c0_5, %c0_6] : memref<128x128xf32, #tpu.memory_space<vmem>>, vector<128x128xf32>
    %cst = arith.constant dense<0.000000e+00> : vector<8x128xf32>
    %10 = tpu.matmul %7, %9, %cst {dimension_numbers = #tpu.dot_dimension_numbers<[1], [1], [0], [0], [0, 0, 1, 0], [], []>} : vector<8x128xf32>, vector<128x128xf32>, vector<8x128xf32> -> vector<8x128xf32>
    %11 = arith.addf %8, %10 : vector<8x128xf32>
    %c0_7 = arith.constant 0 : index
    %c0_8 = arith.constant 0 : index
    %12 = vector.load %arg7[%c0_7, %c0_8] : memref<8x128xf32, #tpu.memory_space<vmem>>, vector<8x128xf32>
    tpu.vector_store %arg7[%c0_7, %c0_8], %11 {strides = array<i32>} : memref<8x128xf32, #tpu.memory_space<vmem>>, vector<8x128xf32>,
    return
  }
  func.func @transform_0(%arg0: i32, %arg1: i32, %arg2: i32) -> (i32, i32) {
    %c0_i32 = arith.constant 0 : i32
    return %arg0, %arg2 : i32, i32
  }
  func.func @transform_1(%arg0: i32, %arg1: i32, %arg2: i32) -> (i32, i32) {
    %c0_i32 = arith.constant 0 : i32
    %c0_i32_0 = arith.constant 0 : i32
    %c0_i32_1 = arith.constant 0 : i32
    return %c0_i32, %c0_i32_0 : i32, i32
  }
  func.func @transform_2(%arg0: i32, %arg1: i32, %arg2: i32) -> (i32, i32) {
    %c0_i32 = arith.constant 0 : i32
    return %arg1, %arg2 : i32, i32
  }
  func.func @transform_3(%arg0: i32, %arg1: i32, %arg2: i32) -> (i32, i32) {
    %c0_i32 = arith.constant 0 : i32
    %c0_i32_0 = arith.constant 0 : i32
    return %c0_i32, %arg1 : i32, i32
  }
  func.func @transform_4(%arg0: i32, %arg1: i32, %arg2: i32) -> (i32, i32) {
    %c0_i32 = arith.constant 0 : i32
    return %arg0, %arg1 : i32, i32
  }
}

</mosaic_0001>

<llo_original>
// kernel: tpu_custom_call.1
$region0: #{tpu_custom_call.1}
  #allocation0 [shape = 'u32[]', space=smem, size = 0x4, offset = 0x4, fixed_abs, tag = 'smem constant byte address 0x4 - core index']
  #allocation1 [shape = 'u32[144,128]{1,0:T(1,128)}', space=vmem, size = 0x12000, scoped, tag = 'internal scratch']
  %s0 = inlined_call_operand.hbm [shape: f32[8,128], index: 0, kind: input, shape index: {}]
  %s1 = inlined_call_operand.vmem [shape: f32[1,128], index: 1, kind: input, shape index: {}]
  %s2 = inlined_call_operand.hbm [shape: f32[128,128], index: 2, kind: input, shape index: {}]
  %s3 = inlined_call_operand.vmem [shape: f32[1,128], index: 3, kind: input, shape index: {}]
  %s4 = inlined_call_operand.hbm [shape: f32[8,128], index: 4, kind: output, shape index: {}]
  %s5 = sld [smem:[#allocation0]]
  $region38: #{tpu_custom_call.1} parent=0
    _
  %s7 = ssub.s32 1, %s5
  %s8 = scalar_select 0, %s7, %s5
  $region1: #{tpu_custom_call.1} parent=0
    #allocation2 [shape = 'u8[4096]{0}', space=vmem, size = 0x1000, scoped, tag = 'input window, operand 0, single buffered']
    #allocation3 [shape = 's32[1]{0}', space=sflag, size = 0x4, scoped, tag = 'scoped memory for tpu_custom_call.1']
    #allocation4 [shape = 's32[1]{0}', space=sflag, size = 0x4, scoped, tag = 'scoped memory for tpu_custom_call.1']
    #allocation5 [shape = 'u8[65536]{0}', space=vmem, size = 0x10000, scoped, tag = 'input window, operand 2, single buffered']
    #allocation6 [shape = 's32[1]{0}', space=sflag, size = 0x4, scoped, tag = 'scoped memory for tpu_custom_call.1']
    #allocation7 [shape = 'u8[4096]{0}', space=vmem, size = 0x1000, scoped, tag = 'output window, operand 0, single buffered']
    %9 = vsyncpa [#allocation3], 0
    %10 = vsyncpa [#allocation6], 0
    %11 = vsyncpa [#allocation4], 0
    // Predicated region
    $region2: #{tpu_custom_call.1} parent=1 // pred_check
      _
    $region3: #{tpu_custom_call.1} parent=1 // pred_check_branch
      %13 = sbr.rel (0) target = $region5
    $region4: #{tpu_custom_call.1} parent=1 // pred_region
      %s15 = ssub.s32 128, 128
      %16 = vsyncadd [#allocation3], %s15
      %s18 = sshll.u32 [#allocation2], 4
      %s19 = int_to_ptr.vmem [resolvable:$true] %s18
      %21 = dma.hbm_to_vmem [thread:$0]  %s0, 128, %s19, [#allocation3]
    $region5: #{tpu_custom_call.1} parent=1 // pred_fallthru
      _
    // Predicated region
    $region6: #{tpu_custom_call.1} parent=1 // pred_check
      _
    $region7: #{tpu_custom_call.1} parent=1 // pred_check_branch
      %23 = sbr.rel (0) target = $region9
    $region8: #{tpu_custom_call.1} parent=1 // pred_region
      _
    $region9: #{tpu_custom_call.1} parent=1 // pred_fallthru
      _
    // Predicated region
    $region10: #{tpu_custom_call.1} parent=1 // pred_check
      _
    $region11: #{tpu_custom_call.1} parent=1 // pred_check_branch
      %25 = sbr.rel (0) target = $region13
    $region12: #{tpu_custom_call.1} parent=1 // pred_region
      %s27 = ssub.s32 2048, 2048
      %28 = vsyncadd [#allocation6], %s27
      %s29 = sshll.u32 [#allocation5], 4
      %s30 = int_to_ptr.vmem [resolvable:$true] %s29
      %35 = dma.hbm_to_vmem [thread:$0]  %s2, 2048, %s30, [#allocation6], 128, 128, 8
    $region13: #{tpu_custom_call.1} parent=1 // pred_fallthru
      _
    // Predicated region
    $region14: #{tpu_custom_call.1} parent=1 // pred_check
      _
    $region15: #{tpu_custom_call.1} parent=1 // pred_check_branch
      %37 = sbr.rel (0) target = $region17
    $region16: #{tpu_custom_call.1} parent=1 // pred_region
      _
    $region17: #{tpu_custom_call.1} parent=1 // pred_fallthru
      _
    // Predicated region
    $region18: #{tpu_custom_call.1} parent=1 // pred_check
      _
    $region19: #{tpu_custom_call.1} parent=1 // pred_check_branch
      %39 = sbr.rel (0) target = $region21
    $region20: #{tpu_custom_call.1} parent=1 // pred_region
      %40 = dma.done [#allocation3], 128
    $region21: #{tpu_custom_call.1} parent=1 // pred_fallthru
      _
    // Predicated region
    $region22: #{tpu_custom_call.1} parent=1 // pred_check
      _
    $region23: #{tpu_custom_call.1} parent=1 // pred_check_branch
      %42 = sbr.rel (0) target = $region25
    $region24: #{tpu_custom_call.1} parent=1 // pred_region
      %43 = dma.done [#allocation6], 2048
    $region25: #{tpu_custom_call.1} parent=1 // pred_fallthru
      _
    %p44 = scmp.eq.s32.totalorder 0, 0
    // Predicated region
    $region26: #{tpu_custom_call.1} parent=1 // pred_check
      %p45 = pneg %p44
    $region27: #{tpu_custom_call.1} parent=1 // pred_check_branch
      %47 = sbr.rel (%p45) target = $region29
    $region28: #{tpu_custom_call.1} parent=1 // pred_region
      %v48 = vld [vmem:[%s3] sm:$0x1]
      %v50 = vlaneseq
      %v51 = vshrl.u32 %v50, 7
      %v52 = vsub.s32 0, %v51
      %v53 = vrot.slane %v48, %v52
      %55 = vst [vmem:[#allocation7] sm:$0xff] %v53
    $region29: #{tpu_custom_call.1} parent=1 // pred_fallthru
      _
    %v56 = vld [vmem:[%s1] sm:$0x1]
    %v57 = vld [vmem:[#allocation2] sm:$0xff]
    %v59 = vlaneseq
    %v60 = vshrl.u32 %v59, 7
    %v61 = vsub.s32 0, %v60
    %v62 = vrot.slane %v56, %v61
    %v64 = vmul.f32 %v57, %v62
    %v65 = vld [vmem:[#allocation7] sm:$0xff]
    %v66 = vld [vmem:[#allocation5] sm:$0xff]
    %v67 = vld [vmem:[#allocation5 + $0x8] sm:$0xff]
    %v68 = vld [vmem:[#allocation5 + $0x10] sm:$0xff]
    %v69 = vld [vmem:[#allocation5 + $0x18] sm:$0xff]
    %v70 = vld [vmem:[#allocation5 + $0x20] sm:$0xff]
    %v71 = vld [vmem:[#allocation5 + $0x28] sm:$0xff]
    %v72 = vld [vmem:[#allocation5 + $0x30] sm:$0xff]
    %v73 = vld [vmem:[#allocation5 + $0x38] sm:$0xff]
    %v74 = vld [vmem:[#allocation5 + $0x40] sm:$0xff]
    %v75 = vld [vmem:[#allocation5 + $0x48] sm:$0xff]
    %v76 = vld [vmem:[#allocation5 + $0x50] sm:$0xff]
    %v77 = vld [vmem:[#allocation5 + $0x58] sm:$0xff]
    %v78 = vld [vmem:[#allocation5 + $0x60] sm:$0xff]
    %v79 = vld [vmem:[#allocation5 + $0x68] sm:$0xff]
    %v80 = vld [vmem:[#allocation5 + $0x70] sm:$0xff]
    %v81 = vld [vmem:[#allocation5 + $0x78] sm:$0xff]
    %82 = vmatprep.subr.mxu0 0.0
    %83 = vmatpush1.xpose.msra.mxu0 %v66
    %84 = vmatprep.subr.mxu0 0.0
    %85 = vmatpush1.xpose.msra.mxu0 %v67
    %86 = vmatprep.subr.mxu0 0.0
    %87 = vmatpush1.xpose.msra.mxu0 %v68
    %88 = vmatprep.subr.mxu0 0.0
    %89 = vmatpush1.xpose.msra.mxu0 %v69
    %90 = vmatprep.subr.mxu0 0.0
    %91 = vmatpush1.xpose.msra.mxu0 %v70
    %92 = vmatprep.subr.mxu0 0.0
    %93 = vmatpush1.xpose.msra.mxu0 %v71
    %94 = vmatprep.subr.mxu0 0.0
    %95 = vmatpush1.xpose.msra.mxu0 %v72
    %96 = vmatprep.subr.mxu0 0.0
    %97 = vmatpush1.xpose.msra.mxu0 %v73
    %98 = vmatprep.subr.mxu0 0.0
    %99 = vmatpush1.xpose.msra.mxu0 %v74
    %100 = vmatprep.subr.mxu0 0.0
    %101 = vmatpush1.xpose.msra.mxu0 %v75
    %102 = vmatprep.subr.mxu0 0.0
    %103 = vmatpush1.xpose.msra.mxu0 %v76
    %104 = vmatprep.subr.mxu0 0.0
    %105 = vmatpush1.xpose.msra.mxu0 %v77
    %106 = vmatprep.subr.mxu0 0.0
    %107 = vmatpush1.xpose.msra.mxu0 %v78
    %108 = vmatprep.subr.mxu0 0.0
    %109 = vmatpush1.xpose.msra.mxu0 %v79
    %110 = vmatprep.subr.mxu0 0.0
    %111 = vmatpush1.xpose.msra.mxu0 %v80
    %112 = vmatprep.subr.mxu0 0.0
    %113 = vmatpush1.xpose.msra.mxu0 %v81
    %114 = vmatprep.subr.mxu0 0.0
    %115 = vmatpush1.xpose.msra.mxu0 0.0
    %116 = vmatprep.subr.mxu0 0.0
    %117 = vmatpush1.xpose.msra.mxu0 0.0
    %118 = vmatprep.subr.mxu0 0.0
    %119 = vmatpush1.xpose.msra.mxu0 0.0
    %120 = vmatprep.subr.mxu0 0.0
    %121 = vmatpush1.xpose.msra.mxu0 0.0
    %122 = vmatprep.subr.mxu0 0.0
    %123 = vmatpush1.xpose.msra.mxu0 0.0
    %124 = vmatprep.subr.mxu0 0.0
    %125 = vmatpush1.xpose.msra.mxu0 0.0
    %126 = vmatprep.subr.mxu0 0.0
    %127 = vmatpush1.xpose.msra.mxu0 0.0
    %128 = vmatprep.subr.mxu0 0.0
    %129 = vmatpush1.xpose.msra.mxu0 0.0
    %130 = vmatprep.subr.mxu0 0.0
    %131 = vmatpush1.xpose.msra.mxu0 0.0
    %132 = vmatprep.subr.mxu0 0.0
    %133 = vmatpush1.xpose.msra.mxu0 0.0
    %134 = vmatprep.subr.mxu0 0.0
    %135 = vmatpush1.xpose.msra.mxu0 0.0
    %136 = vmatprep.subr.mxu0 0.0
    %137 = vmatpush1.xpose.msra.mxu0 0.0
    %138 = vmatprep.subr.mxu0 0.0
    %139 = vmatpush1.xpose.msra.mxu0 0.0
    %140 = vmatprep.subr.mxu0 0.0
    %141 = vmatpush1.xpose.msra.mxu0 0.0
    %142 = vmatprep.subr.mxu0 0.0
    %143 = vmatpush1.xpose.msra.mxu0 0.0
    %144 = vmatprep.subr.mxu0 0.0
    %145 = vmatpush1.xpose.msra.mxu0 0.0
    %146 = vmatprep.mubr.f32.mxu0 0.0
    %147 = vmatmul.mubr.f32.gmra.mrb[0].mxu0 %v64
    %v148 = vpop.f32.mrb[0].mxu0
    %v149 = vadd.f32 0.0, %v148
    %v150 = vpop.f32.mrb[0].mxu0
    %151 = vdwg.mxu0
    %v152 = vadd.f32 %v65, %v149
    %153 = vst [vmem:[#allocation7] sm:$0xff] %v152
    // Predicated region
    $region30: #{tpu_custom_call.1} parent=1 // pred_check
      _
    $region31: #{tpu_custom_call.1} parent=1 // pred_check_branch
      %155 = sbr.rel (0) target = $region33
    $region32: #{tpu_custom_call.1} parent=1 // pred_region
      %s157 = ssub.s32 128, 128
      %158 = vsyncadd [#allocation4], %s157
      %s160 = sshll.u32 [#allocation7], 4
      %s161 = int_to_ptr.vmem [resolvable:$true] %s160
      %163 = dma.vmem_to_hbm [thread:$0]  %s161, 128, %s4, [#allocation4]
    $region33: #{tpu_custom_call.1} parent=1 // pred_fallthru
      _
    // Predicated region
    $region34: #{tpu_custom_call.1} parent=1 // pred_check
      _
    $region35: #{tpu_custom_call.1} parent=1 // pred_check_branch
      %165 = sbr.rel (0) target = $region37
    $region36: #{tpu_custom_call.1} parent=1 // pred_region
      %166 = dma.done [#allocation4], 128
    $region37: #{tpu_custom_call.1} parent=1 // pred_fallthru
      _
    %167 = vsyncpa [#allocation3], 1
    %168 = vsyncpa [#allocation6], 1
    %169 = vsyncpa [#allocation4], 1

</llo_original>
